<compile_context>
chip_gen: v7x
topology: tpu7x:2x2x1
jax: 0.10.0
libtpu: 0.0.40
codegen_flags: <defaults>
</compile_context>

<pallas_src>
import numpy as np
import jax
import jax.numpy as jnp
from jax.experimental import pallas as pl
from jax.experimental.pallas import tpu as pltpu


# --------------------------------------------------------------------------
# Deterministic parameter construction (numpy, mirrors the torch __init__)
# --------------------------------------------------------------------------
def _nextpow2(a):
    return int(np.ceil(np.log2(a)))


def _hann_periodic(l):
    # scipy.signal.get_window('hann', l, fftbins=True)
    m = int(l)
    n = np.arange(m)
    return 0.5 - 0.5 * np.cos(2.0 * np.pi * n / m)


def _create_cqt_kernels(Q, fs, fmin, n_bins, bins_per_octave, norm):
    """Time-domain CQT kernels (window='hann'), as in the torch module."""
    fftLen = 2 ** _nextpow2(np.ceil(Q * fs / fmin))
    freqs = fmin * 2.0 ** (np.arange(n_bins) / float(bins_per_octave))
    if np.max(freqs) > fs / 2:
        raise ValueError(
            "The top bin {}Hz has exceeded the Nyquist frequency".format(np.max(freqs)))
    tempKernel = np.zeros((int(n_bins), int(fftLen)), dtype=np.complex64)
    for k in range(int(n_bins)):
        freq = freqs[k]
        l = np.ceil(Q * fs / freq)
        if l % 2 == 1:
            start = int(np.ceil(fftLen / 2.0 - l / 2.0)) - 1
        else:
            start = int(np.ceil(fftLen / 2.0 - l / 2.0))
        sig = (_hann_periodic(l)
               * np.exp(np.r_[-l // 2:l // 2] * 1j * 2 * np.pi * freq / fs) / l)
        if norm:
            tempKernel[k, start:start + int(l)] = sig / np.linalg.norm(sig, norm)
        else:
            tempKernel[k, start:start + int(l)] = sig
    return tempKernel, int(fftLen)


def _vmem_capacity_bytes():
    """Generation-aware VMEM capacity; conservative v7x fallback."""
    try:
        info = pltpu.get_tpu_info()
        cap = getattr(info, "vmem_capacity_bytes", None)
        if cap:
            return int(cap)
    except Exception:
        pass
    return 64 * 1024 * 1024


# --------------------------------------------------------------------------
# Pallas kernel: one (batch, time-tile) block.
#   s_ref    : (hop, tile_t)        compute dtype  -- streamed signal phases
#   look_ref : (hop, 128)           compute dtype  -- next 128 signal columns
#   w_ref    : (C, 2*nb_pad, hop)   compute dtype  -- fused real|imag CQT kernels
#   o_ref    : (nb_pad, tile_t)     output dtype   -- CQT magnitude
# --------------------------------------------------------------------------
def _cqt1992v2_kernel(s_ref, look_ref, w_ref, o_ref):
    n_chunks = w_ref.shape[0]
    nb_pad = o_ref.shape[0]
    tile_t = o_ref.shape[1]

    # columns [t0, t0 + tile_t + 128) of the streamed signal
    slab = jnp.concatenate([s_ref[...], look_ref[...]], axis=-1)

    acc = jnp.zeros((2 * nb_pad, tile_t), dtype=jnp.float32)
    for c in range(n_chunks):                       # static unroll, C = ceil(n_fft/hop)
        acc = acc + jnp.dot(w_ref[c], slab[:, c:c + tile_t],
                            preferred_element_type=jnp.float32)

    real = acc[:nb_pad, :]
    imag = acc[nb_pad:, :]
    # sqrt (not x*rsqrt): zero-padded bins / time columns stay 0, never NaN.
    o_ref[...] = jnp.sqrt(real * real + imag * imag).astype(o_ref.dtype)


# --------------------------------------------------------------------------
# Module wrapper
# --------------------------------------------------------------------------
class CQT1992v2:
    def __init__(self, sr=22050, hop_length=512, fmin=220, fmax=None, n_bins=84,
                 bins_per_octave=12, norm=1, window='hann', center=True,
                 pad_mode='reflect', compute_dtype=jnp.bfloat16,
                 output_dtype=jnp.float32, max_tile_t=2048):
        assert window == 'hann', "only 'hann' implemented (module default)"
        if fmax is not None:
            n_bins = int(np.ceil(bins_per_octave * np.log2(fmax / fmin)))

        self.hop_length = int(hop_length)
        self.center = center
        self.pad_mode = pad_mode
        self.compute_dtype = compute_dtype
        self.output_dtype = output_dtype

        Q = 1.0 / (2.0 ** (1.0 / bins_per_octave) - 1.0)
        temp_kernel, self.kernal_width = _create_cqt_kernels(
            Q, sr, fmin, n_bins, bins_per_octave, norm)
        self.n_bins = int(n_bins)

        hop = self.hop_length
        n_fft = self.kernal_width
        # hop-decomposition of the strided conv: kernel width zero-extended to a
        # multiple of hop; C chunks are accumulated inside the Pallas kernel.
        self.n_chunks = -(-n_fft // hop)            # ceil(n_fft / hop)
        if self.n_chunks > 128:
            # TODO(synk): support hop << n_fft (n_fft/hop > 128) with a wider /
            # multi-block lookahead window.
            raise NotImplementedError(
                "hop_length too small relative to the CQT kernel width")
        n_fft_pad = self.n_chunks * hop

        # n_bins padded to a multiple of 16 (bf16 sublane packing); real|imag fused
        # into one weight so the MXU sees a single 2*nb_pad-row pass per chunk.
        self.nb_pad = ((self.n_bins + 15) // 16) * 16
        k = np.zeros((2 * self.nb_pad, n_fft_pad), np.float32)
        k[:self.n_bins, :n_fft] = temp_kernel.real
        k[self.nb_pad:self.nb_pad + self.n_bins, :n_fft] = temp_kernel.imag
        # Pre-split into hop-sized chunks: weights[c] == k[:, c*hop:(c+1)*hop].
        w = k.reshape(2 * self.nb_pad, self.n_chunks, hop).transpose(1, 0, 2)
        self.weights = jnp.asarray(w, dtype=compute_dtype)   # (C, 2*nb_pad, hop)
        # TODO(synk): for bit-closeness to the f32 nnAudio kernels, pass
        # compute_dtype=jnp.float32 (slower f32 MXU path).

        # ---- generation-aware time-tile sizing / VMEM budget ----------------
        wsz = jnp.dtype(compute_dtype).itemsize
        osz = jnp.dtype(output_dtype).itemsize
        self._vmem_cap = _vmem_capacity_bytes()
        budget = min(int(self._vmem_cap * 0.45), 40 * 1024 * 1024)
        # bytes independent of tile_t: lookahead buffers + resident weights (+margin)
        self._vmem_fixed = (2 * hop * 128 * wsz
                            + 2 * self.n_chunks * 2 * self.nb_pad * hop * wsz)
        # bytes per output column
        self._vmem_per_col = (
            2 * hop * wsz                 # signal tile, double buffered
            + 2 * hop * wsz               # in-kernel slab + shifted operand copy
            + 5 * self.nb_pad * 4         # f32 accumulator + real/imag/mag temps
            + 2 * self.nb_pad * osz)      # output tile, double buffered
        tt = (budget - self._vmem_fixed) // self._vmem_per_col
        tt = max(128, min(int(max_tile_t), (tt // 128) * 128))
        self.max_tile_t = int(tt)

    # ---- glue: broadcast / pad / phase reshape (pure indexing) ----
    def _prepare_signal(self, x):
        if x.ndim == 1:
            x = x[None, :]
        elif x.ndim == 3:
            if x.shape[1] != 1:
                raise ValueError("only single-channel audio supported")
            x = x[:, 0, :]
        elif x.ndim != 2:
            raise ValueError("Only (len,), (batch,len) or (batch,1,len) supported")

        n_fft, hop = self.kernal_width, self.hop_length
        x = x.astype(jnp.float32)
        if self.center:
            pad = n_fft // 2
            if self.pad_mode == 'constant':
                mode = 'constant'
            else:
                if x.shape[1] <= pad:
                    raise ValueError("input too short for reflect padding")
                mode = 'reflect'
            x = jnp.pad(x, ((0, 0), (pad, pad)), mode=mode)

        batch, Ly = x.shape
        if Ly < n_fft:
            raise ValueError("input too short for the CQT kernel width")
        T = (Ly - n_fft) // hop + 1                 # torch conv1d output length

        # Time-tile size & padded extents (all multiples of 128 lanes).
        tile_t = min(self.max_tile_t, ((T + 127) // 128) * 128)
        t_pad = ((T + tile_t - 1) // tile_t) * tile_t
        n_cols = t_pad + tile_t                     # + tile_t: room for lookahead block

        # Streamed layout: S[b, p, m] = y[b, m*hop + p].  Cast to the compute
        # dtype BEFORE any reshaping; no im2col, no frame duplication.
        x = x.astype(self.compute_dtype)
        x = jnp.pad(x, ((0, 0), (0, n_cols * hop - Ly)))
        s = x.reshape(batch, n_cols, hop).transpose(0, 2, 1)   # (batch, hop, n_cols)
        return s, T, t_pad, tile_t

    # ---- forward via Pallas ----
    def __call__(self, x):
        s, T, t_pad, tile_t = self._prepare_signal(x)
        batch, hop, n_cols = s.shape
        C, nb_pad = self.n_chunks, self.nb_pad
        n_fft_pad = C * hop
        wsz = jnp.dtype(self.compute_dtype).itemsize
        osz = jnp.dtype(self.output_dtype).itemsize
        n_t = t_pad // tile_t
        look_step = tile_t // 128

        est = self._vmem_fixed + self._vmem_per_col * tile_t
        vmem_limit = int(min(int(self._vmem_cap * 0.75),
                             max(2 * est, 16 * 1024 * 1024)))

        cost = pl.CostEstimate(
            flops=2 * batch * t_pad * (2 * nb_pad) * n_fft_pad,
            transcendentals=batch * nb_pad * t_pad,
            bytes_accessed=(batch * hop * (t_pad + n_t * 128) * wsz
                            + 2 * C * nb_pad * hop * wsz
                            + batch * nb_pad * t_pad * osz))

        out = pl.pallas_call(
            _cqt1992v2_kernel,
            out_shape=jax.ShapeDtypeStruct((batch, nb_pad, t_pad), self.output_dtype),
            grid_spec=pltpu.PrefetchScalarGridSpec(
                num_scalar_prefetch=0,
                grid=(batch, n_t),
                in_specs=[
                    # streamed signal tile
                    pl.BlockSpec((pl.Squeezed(), hop, tile_t),
                                 lambda b, t: (b, 0, t)),
                    # 128-column lookahead (covers the c = 1..C-1 column shifts)
                    pl.BlockSpec((pl.Squeezed(), hop, 128),
                                 lambda b, t: (b, 0, (t + 1) * look_step)),
                    # fused real|imag CQT kernels, resident in VMEM
                    pl.BlockSpec((C, 2 * nb_pad, hop), lambda b, t: (0, 0, 0),
                                 pipeline_mode=pl.Buffered(1)),
                ],
                out_specs=pl.BlockSpec((pl.Squeezed(), nb_pad, tile_t),
                                       lambda b, t: (b, 0, t)),
            ),
            compiler_params=pltpu.CompilerParams(
                dimension_semantics=("parallel", "parallel"),
                vmem_limit_bytes=vmem_limit),
            cost_estimate=cost,
        )(s, s, self.weights)

        return out[:, :self.n_bins, :T]

    # ---- pure-JAX reference (same compute dtypes) for verification ----
    def reference(self, x):
        s, T, t_pad, _ = self._prepare_signal(x)
        nb_pad, C = self.nb_pad, self.n_chunks
        acc = jnp.zeros((s.shape[0], 2 * nb_pad, t_pad), jnp.float32)
        for c in range(C):
            acc = acc + jnp.einsum('kp,bpt->bkt', self.weights[c],
                                   s[:, :, c:c + t_pad],
                                   preferred_element_type=jnp.float32)
        real, imag = acc[:, :nb_pad], acc[:, nb_pad:]
        mag = jnp.sqrt(real * real + imag * imag)
        return mag[:, :self.n_bins, :T].astype(self.output_dtype)


# --------------------------------------------------------------------------
if __name__ == "__main__":
    key = jax.random.PRNGKey(0)
    batch, length = 2, 1024
    x = jax.random.normal(key, (batch, length), dtype=jnp.float32)

    # Small-but-faithful config: kernal_width = 512, hop = 128 (C = 4 chunks),
    # n_bins = 36 -> output (2, 36, 9).
    cqt = CQT1992v2(sr=4000, hop_length=128, fmin=220, n_bins=36,
                    bins_per_octave=12, norm=1, window='hann',
                    center=True, pad_mode='reflect')

    out = jax.block_until_ready(cqt(x))
    ref = jax.block_until_ready(cqt.reference(x))

    assert out.shape == ref.shape == (batch, 36, 9), out.shape
    assert np.isfinite(np.asarray(out)).all()
    np.testing.assert_allclose(np.asarray(out), np.asarray(ref),
                               rtol=1e-2, atol=1e-4)
    print("KERNEL_OK")
</pallas_src>

<mosaic_0001>
module attributes {stable_mosaic.version = 11 : i64} {
  func.func @_cqt1992v2_kernel(%arg0: i32, %arg1: i32, %arg2: memref<1x128x128xbf16, #tpu.memory_space<vmem>>, %arg3: memref<1x128x128xbf16, #tpu.memory_space<vmem>>, %arg4: memref<4x96x128xbf16, #tpu.memory_space<vmem>>, %arg5: memref<1x48x128xf32, #tpu.memory_space<vmem>>) attributes {dimension_semantics = [#tpu.dimension_semantics<parallel>, #tpu.dimension_semantics<parallel>], iteration_bounds = array<i64: 2, 1>, scalar_prefetch = 0 : i64, scratch_operands = 0 : i64, tpu.core_type = #tpu.core_type<tc>, window_params = [{transform_indices = @transform_0, window_bounds = array<i64: 1, 128, 128>}, {transform_indices = @transform_1, window_bounds = array<i64: 1, 128, 128>}, {pipeline_mode = #tpu.pipeline_mode<synchronous>, transform_indices = @transform_2, window_bounds = array<i64: 4, 96, 128>}, {transform_indices = @transform_3, window_bounds = array<i64: 1, 48, 128>}]} {
    %c0 = arith.constant 0 : index
    %c0_0 = arith.constant 0 : index
    %c0_1 = arith.constant 0 : index
    %0 = vector.load %arg2[%c0, %c0_0, %c0_1] : memref<1x128x128xbf16, #tpu.memory_space<vmem>>, vector<1x128x128xbf16>
    %1 = vector.shape_cast %0 : vector<1x128x128xbf16> to vector<128x128xbf16>
    %c0_2 = arith.constant 0 : index
    %c0_3 = arith.constant 0 : index
    %c0_4 = arith.constant 0 : index
    %2 = vector.load %arg3[%c0_2, %c0_3, %c0_4] : memref<1x128x128xbf16, #tpu.memory_space<vmem>>, vector<1x128x128xbf16>
    %3 = vector.shape_cast %2 : vector<1x128x128xbf16> to vector<128x128xbf16>
    %4 = tpu.concatenate %1, %3 in 1 : vector<128x128xbf16>, vector<128x128xbf16> -> vector<128x256xbf16>
    %cst = arith.constant 0.000000e+00 : f32
    %5 = vector.broadcast %cst : f32 to vector<96x128xf32>
    %c0_5 = arith.constant 0 : index
    %c0_6 = arith.constant 0 : index
    %c0_7 = arith.constant 0 : index
    %6 = vector.load %arg4[%c0_5, %c0_6, %c0_7] : memref<4x96x128xbf16, #tpu.memory_space<vmem>>, vector<1x96x128xbf16>
    %7 = vector.shape_cast %6 : vector<1x96x128xbf16> to vector<96x128xbf16>
    %8 = vector.extract_strided_slice %4 {offsets = [0, 0], sizes = [128, 128], strides = [1, 1]} : vector<128x256xbf16> to vector<128x128xbf16>
    %cst_8 = arith.constant dense<0.000000e+00> : vector<96x128xf32>
    %9 = tpu.matmul %7, %8, %cst_8 {dimension_numbers = #tpu.dot_dimension_numbers<[1], [0], [0], [1], [0, 0, 1, 1], [], []>} : vector<96x128xbf16>, vector<128x128xbf16>, vector<96x128xf32> -> vector<96x128xf32>
    %10 = arith.addf %5, %9 : vector<96x128xf32>
    %c1 = arith.constant 1 : index
    %c0_9 = arith.constant 0 : index
    %c0_10 = arith.constant 0 : index
    %11 = vector.load %arg4[%c1, %c0_9, %c0_10] : memref<4x96x128xbf16, #tpu.memory_space<vmem>>, vector<1x96x128xbf16>
    %12 = vector.shape_cast %11 : vector<1x96x128xbf16> to vector<96x128xbf16>
    %13 = vector.extract_strided_slice %4 {offsets = [0, 1], sizes = [128, 128], strides = [1, 1]} : vector<128x256xbf16> to vector<128x128xbf16>
    %cst_11 = arith.constant dense<0.000000e+00> : vector<96x128xf32>
    %14 = tpu.matmul %12, %13, %cst_11 {dimension_numbers = #tpu.dot_dimension_numbers<[1], [0], [0], [1], [0, 0, 1, 1], [], []>} : vector<96x128xbf16>, vector<128x128xbf16>, vector<96x128xf32> -> vector<96x128xf32>
    %15 = arith.addf %10, %14 : vector<96x128xf32>
    %c2 = arith.constant 2 : index
    %c0_12 = arith.constant 0 : index
    %c0_13 = arith.constant 0 : index
    %16 = vector.load %arg4[%c2, %c0_12, %c0_13] : memref<4x96x128xbf16, #tpu.memory_space<vmem>>, vector<1x96x128xbf16>
    %17 = vector.shape_cast %16 : vector<1x96x128xbf16> to vector<96x128xbf16>
    %18 = vector.extract_strided_slice %4 {offsets = [0, 2], sizes = [128, 128], strides = [1, 1]} : vector<128x256xbf16> to vector<128x128xbf16>
    %cst_14 = arith.constant dense<0.000000e+00> : vector<96x128xf32>
    %19 = tpu.matmul %17, %18, %cst_14 {dimension_numbers = #tpu.dot_dimension_numbers<[1], [0], [0], [1], [0, 0, 1, 1], [], []>} : vector<96x128xbf16>, vector<128x128xbf16>, vector<96x128xf32> -> vector<96x128xf32>
    %20 = arith.addf %15, %19 : vector<96x128xf32>
    %c3 = arith.constant 3 : index
    %c0_15 = arith.constant 0 : index
    %c0_16 = arith.constant 0 : index
    %21 = vector.load %arg4[%c3, %c0_15, %c0_16] : memref<4x96x128xbf16, #tpu.memory_space<vmem>>, vector<1x96x128xbf16>
    %22 = vector.shape_cast %21 : vector<1x96x128xbf16> to vector<96x128xbf16>
    %23 = vector.extract_strided_slice %4 {offsets = [0, 3], sizes = [128, 128], strides = [1, 1]} : vector<128x256xbf16> to vector<128x128xbf16>
    %cst_17 = arith.constant dense<0.000000e+00> : vector<96x128xf32>
    %24 = tpu.matmul %22, %23, %cst_17 {dimension_numbers = #tpu.dot_dimension_numbers<[1], [0], [0], [1], [0, 0, 1, 1], [], []>} : vector<96x128xbf16>, vector<128x128xbf16>, vector<96x128xf32> -> vector<96x128xf32>
    %25 = arith.addf %20, %24 : vector<96x128xf32>
    %26 = vector.extract_strided_slice %25 {offsets = [0, 0], sizes = [48, 128], strides = [1, 1]} : vector<96x128xf32> to vector<48x128xf32>
    %27 = vector.extract_strided_slice %25 {offsets = [48, 0], sizes = [48, 128], strides = [1, 1]} : vector<96x128xf32> to vector<48x128xf32>
    %28 = arith.mulf %26, %26 : vector<48x128xf32>
    %29 = arith.mulf %27, %27 : vector<48x128xf32>
    %30 = arith.addf %28, %29 : vector<48x128xf32>
    %31 = math.sqrt %30 : vector<48x128xf32>
    %c0_18 = arith.constant 0 : index
    %c0_19 = arith.constant 0 : index
    %c0_20 = arith.constant 0 : index
    %32 = vector.load %arg5[%c0_18, %c0_19, %c0_20] : memref<1x48x128xf32, #tpu.memory_space<vmem>>, vector<1x48x128xf32>
    %33 = vector.shape_cast %32 : vector<1x48x128xf32> to vector<48x128xf32>
    %34 = vector.shape_cast %31 : vector<48x128xf32> to vector<1x48x128xf32>
    tpu.vector_store %arg5[%c0_18, %c0_19, %c0_20], %34 {strides = array<i32>} : memref<1x48x128xf32, #tpu.memory_space<vmem>>, vector<1x48x128xf32>,
    return
  }
  func.func @transform_0(%arg0: i32, %arg1: i32) -> (i32, i32, i32) {
    %c0_i32 = arith.constant 0 : i32
    %c0_i32_0 = arith.constant 0 : i32
    return %arg0, %c0_i32, %arg1 : i32, i32, i32
  }
  func.func @transform_1(%arg0: i32, %arg1: i32) -> (i32, i32, i32) {
    %c1_i32 = arith.constant 1 : i32
    %0 = arith.addi %arg1, %c1_i32 : i32
    %c1_i32_0 = arith.constant 1 : i32
    %1 = arith.muli %0, %c1_i32_0 : i32
    %c0_i32 = arith.constant 0 : i32
    %c0_i32_1 = arith.constant 0 : i32
    return %arg0, %c0_i32, %1 : i32, i32, i32
  }
  func.func @transform_2(%arg0: i32, %arg1: i32) -> (i32, i32, i32) {
    %c0_i32 = arith.constant 0 : i32
    %c0_i32_0 = arith.constant 0 : i32
    %c0_i32_1 = arith.constant 0 : i32
    %c0_i32_2 = arith.constant 0 : i32
    return %c0_i32, %c0_i32_0, %c0_i32_1 : i32, i32, i32
  }
  func.func @transform_3(%arg0: i32, %arg1: i32) -> (i32, i32, i32) {
    %c0_i32 = arith.constant 0 : i32
    %c0_i32_0 = arith.constant 0 : i32
    return %arg0, %c0_i32, %arg1 : i32, i32, i32
  }
}

</mosaic_0001>

<llo_original>
// kernel: tpu_custom_call.1
$region0: #{tpu_custom_call.1}
  #allocation0 [shape = 'u32[]', space=smem, size = 0x4, offset = 0x4, fixed_abs, tag = 'smem constant byte address 0x4 - core index']
  #allocation1 [shape = 'u32[144,128]{1,0:T(1,128)}', space=vmem, size = 0x12000, scoped, tag = 'internal scratch']
  %s0 = inlined_call_operand.hbm [shape: bf16[2,128,256], index: 0, kind: input, shape index: {}]
  %s1 = inlined_call_operand.hbm [shape: bf16[2,128,256], index: 1, kind: input, shape index: {}]
  %s2 = inlined_call_operand.hbm [shape: bf16[4,96,128], index: 2, kind: input, shape index: {}]
  %s3 = inlined_call_operand.hbm [shape: f32[2,48,128], index: 3, kind: output, shape index: {}]
  %s4 = sld [smem:[#allocation0]]
  $region57: #{tpu_custom_call.1} parent=0
    _
  %s6 = ssub.s32 1, %s4
  %s7 = scalar_select 0, %s6, %s4
  $region1: #{tpu_custom_call.1} parent=0
    #allocation2 [shape = 'u8[65536]{0}', space=vmem, size = 0x10000, scoped, tag = 'input window, operand 0']
    #allocation3 [shape = 's32[2]{0}', space=sflag, size = 0x8, scoped, tag = 'scoped memory for tpu_custom_call.1']
    #allocation4 [shape = 's32[2]{0}', space=sflag, size = 0x8, scoped, tag = 'scoped memory for tpu_custom_call.1']
    #allocation5 [shape = 'u8[65536]{0}', space=vmem, size = 0x10000, scoped, tag = 'input window, operand 1']
    #allocation6 [shape = 's32[2]{0}', space=sflag, size = 0x8, scoped, tag = 'scoped memory for tpu_custom_call.1']
    #allocation7 [shape = 'u8[98304]{0}', space=vmem, size = 0x18000, scoped, tag = 'input window, operand 2, single buffered']
    #allocation8 [shape = 'u8[49152]{0}', space=vmem, size = 0xc000, scoped, tag = 'output window, operand 0']
    %8 = vsyncpa [#allocation3], 0
    %s9 = scalar_lea.sflag [#allocation3], 1
    %10 = vsyncpa %s9, 0
    %11 = vsyncpa [#allocation6], 0
    %s12 = scalar_lea.sflag [#allocation6], 1
    %13 = vsyncpa %s12, 0
    %14 = vsyncpa [#allocation4], 0
    %s15 = scalar_lea.sflag [#allocation4], 1
    %16 = vsyncpa %s15, 0
    loop: start=0, step=1, limit=4
    $region2: #{tpu_custom_call.1} parent=1 // loop_pre_header
      _
    $region3: #{tpu_custom_call.1} parent=1 // loop_header
      %s18 = sphi 0, %s22
      %p19 = scmp.ge.s32.totalorder %s18, 4
      %s25 = sphi 0, %s37
      %s26 = sphi 0, %s33
      %s27 = sphi 0, %s25
      %s28 = sphi 0, %s26
      %s29 = sphi 0, %s27
      %s30 = sphi 0, %s28
      %s42 = sphi 0, %s44
      %s45 = sphi 0, %s42
      %s46 = sphi 0, %s45
      %s62 = sphi 0, %s46
      %s72 = sphi 0, %s74
      %s75 = sphi 0, %s72
      %s76 = sphi 0, %s75
      %s92 = sphi 0, %s76
      %s96 = sphi 0, %s96
      %s98 = sphi 0, %s96
      %s99 = sphi 0, %s98
      %s113 = sphi 0, %s99
      %s121 = sphi 0, %s123
      %s124 = sphi 0, %s121
      %s125 = sphi 0, %s124
      %s141 = sphi 0, %s125
    $region4: #{tpu_custom_call.1} parent=1 // loop_header_branch
      %21 = sbr.rel (%p19) target = $region8
    $region5: #{tpu_custom_call.1} parent=1 // loop_body
      %s23 = ssub.s32 %s18, 1
      %s24 = ssub.s32 %s18, 2
      %s31 = sadd.s32 1, %s26
      %p32 = scmp.ge.s32.totalorder %s31, 1
      %s33 = scalar_select %p32, 0, %s31
      %s34 = sadd.s32 1, %s25
      %s35 = scalar_select %p32, %s34, %s25
      %p36 = scmp.ge.s32.totalorder %s35, 2
      %s37 = scalar_select %p36, 0, %s35
      %s38 = ssub.s32 %s25, %s37
      %s39 = ssub.s32 %s26, %s33
      %s40 = sor.u32 %s38, %s39
      %p41 = scmp.eq.s32.totalorder %s40, 0
      %s43 = sadd.s32 %s42, 1
      %s44 = scalar_select %p41, %s42, %s43
      %p47 = pneg %p41
      %p48 = scmp.eq.s32.totalorder %s18, 1
      %p49 = por %p47, %p48
      %p50 = scmp.ne.s32.totalorder %s42, %s45
      %p51 = scmp.eq.s32.totalorder %s18, 0
      %p52 = por %p50, %p51
      %p53 = scmp.ne.s32.totalorder %s42, %s45
      %p54 = scmp.eq.s32.totalorder %s23, 1
      %p55 = por %p53, %p54
      %p56 = scmp.ne.s32.totalorder %s45, %s46
      %p57 = scmp.eq.s32.totalorder %s23, 0
      %p58 = por %p56, %p57
      %p59 = scmp.ne.s32.totalorder %s45, %s46
      %p60 = scmp.eq.s32.totalorder %s24, 1
      %p61 = por %p59, %p60
      %p63 = scmp.ne.s32.totalorder %s46, %s62
      %p64 = scmp.eq.s32.totalorder %s24, 0
      %p65 = por %p63, %p64
      %s66 = sadd.s32 %s26, 1
      %s67 = sadd.s32 %s33, 1
      %s68 = ssub.s32 %s25, %s37
      %s69 = ssub.s32 %s66, %s67
      %s70 = sor.u32 %s68, %s69
      %p71 = scmp.eq.s32.totalorder %s70, 0
      %s73 = sadd.s32 %s72, 1
      %s74 = scalar_select %p71, %s72, %s73
      %p77 = pneg %p71
      %p78 = scmp.eq.s32.totalorder %s18, 1
      %p79 = por %p77, %p78
      %p80 = scmp.ne.s32.totalorder %s72, %s75
      %p81 = scmp.eq.s32.totalorder %s18, 0
      %p82 = por %p80, %p81
      %p83 = scmp.ne.s32.totalorder %s72, %s75
      %p84 = scmp.eq.s32.totalorder %s23, 1
      %p85 = por %p83, %p84
      %p86 = scmp.ne.s32.totalorder %s75, %s76
      %p87 = scmp.eq.s32.totalorder %s23, 0
      %p88 = por %p86, %p87
      %p89 = scmp.ne.s32.totalorder %s75, %s76
      %p90 = scmp.eq.s32.totalorder %s24, 1
      %p91 = por %p89, %p90
      %p93 = scmp.ne.s32.totalorder %s76, %s92
      %p94 = scmp.eq.s32.totalorder %s24, 0
      %p95 = por %p93, %p94
      %s97 = sadd.s32 %s96, 1
      %p100 = scmp.eq.s32.totalorder %s18, 1
      %p101 = scmp.ne.s32.totalorder %s96, %s98
      %p102 = scmp.eq.s32.totalorder %s18, 0
      %p103 = por %p101, %p102
      %p104 = scmp.ne.s32.totalorder %s96, %s98
      %p105 = scmp.eq.s32.totalorder %s23, 1
      %p106 = por %p104, %p105
      %p107 = scmp.ne.s32.totalorder %s98, %s99
      %p108 = scmp.eq.s32.totalorder %s23, 0
      %p109 = por %p107, %p108
      %p110 = scmp.ne.s32.totalorder %s98, %s99
      %p111 = scmp.eq.s32.totalorder %s24, 1
      %p112 = por %p110, %p111
      %p114 = scmp.ne.s32.totalorder %s99, %s113
      %p115 = scmp.eq.s32.totalorder %s24, 0
      %p116 = por %p114, %p115
      %s117 = ssub.s32 %s25, %s37
      %s118 = ssub.s32 %s26, %s33
      %s119 = sor.u32 %s117, %s118
      %p120 = scmp.eq.s32.totalorder %s119, 0
      %s122 = sadd.s32 %s121, 1
      %s123 = scalar_select %p120, %s121, %s122
      %p126 = pneg %p120
      %p127 = scmp.eq.s32.totalorder %s18, 1
      %p128 = por %p126, %p127
      %p129 = scmp.ne.s32.totalorder %s121, %s124
      %p130 = scmp.eq.s32.totalorder %s18, 0
      %p131 = por %p129, %p130
      %p132 = scmp.ne.s32.totalorder %s121, %s124
      %p133 = scmp.eq.s32.totalorder %s23, 1
      %p134 = por %p132, %p133
      %p135 = scmp.ne.s32.totalorder %s124, %s125
      %p136 = scmp.eq.s32.totalorder %s23, 0
      %p137 = por %p135, %p136
      %p138 = scmp.ne.s32.totalorder %s124, %s125
      %p139 = scmp.eq.s32.totalorder %s24, 1
      %p140 = por %p138, %p139
      %p142 = scmp.ne.s32.totalorder %s125, %s141
      %p143 = scmp.eq.s32.totalorder %s24, 0
      %p144 = por %p142, %p143
      %p145 = scmp.le.s32.totalorder 1, %s18
      %p146 = scmp.lt.s32.totalorder %s18, 3
      %p147 = pnand %p145, %p146
      %p148 = pneg %p147
      // Predicated region
      $region9: #{tpu_custom_call.1} parent=5 // pred_check
        _
      $region10: #{tpu_custom_call.1} parent=5 // pred_check_branch
        %150 = sbr.rel (%p147) target = $region12
      $region11: #{tpu_custom_call.1} parent=5 // pred_region
        %s151 = ssub.s32 %s18, 1
        // Predicated region
        $region13: #{tpu_custom_call.1} parent=11 // pred_check
          %p152 = pneg %p109
        $region14: #{tpu_custom_call.1} parent=11 // pred_check_branch
          %154 = sbr.rel (%p152) target = $region16
        $region15: #{tpu_custom_call.1} parent=11 // pred_region
          %s156 = ssub.s32 3072, 3072
          %157 = vsyncadd [#allocation6], %s156
          %s158 = sshll.u32 [#allocation7], 4
          %s159 = int_to_ptr.vmem [resolvable:$true] %s158
          %164 = dma.hbm_to_vmem [thread:$0]  %s2, 3072, %s159, [#allocation6], 64, 64, 4
        $region16: #{tpu_custom_call.1} parent=11 // pred_fallthru
          _
      $region12: #{tpu_custom_call.1} parent=5 // pred_fallthru
        _
      %p165 = scmp.lt.s32.totalorder %s18, 2
      // Predicated region
      $region17: #{tpu_custom_call.1} parent=5 // pred_check
        %p166 = pneg %p165
      $region18: #{tpu_custom_call.1} parent=5 // pred_check_branch
        %168 = sbr.rel (%p166) target = $region20
      $region19: #{tpu_custom_call.1} parent=5 // pred_region
        // Predicated region
        $region21: #{tpu_custom_call.1} parent=19 // pred_check
          %p169 = pneg %p52
        $region22: #{tpu_custom_call.1} parent=19 // pred_check_branch
          %171 = sbr.rel (%p169) target = $region24
        $region23: #{tpu_custom_call.1} parent=19 // pred_region
          %s172 = sand.u32 %s42, 1
          %s173 = scalar_lea.sflag [#allocation3], %s172
          %s174 = sand.u32 %s42, 1
          %s175 = smul.addr %s174, 64
          %s176 = scalar_lea.vmem [#allocation2], %s175
          %s178 = ssub.s32 1024, 1024
          %179 = vsyncadd %s173, %s178
          %s180 = smul.addr %s25, 32
          %s181 = sadd.s32 %s26, %s180
          %s182 = smul.addr %s181, 64
          %s183 = scalar_lea.hbm %s0, %s182
          %s184 = sshll.u32 %s176, 4
          %s185 = int_to_ptr.vmem [resolvable:$true] %s184
          %190 = dma.hbm_to_vmem [thread:$0]  %s183, 1024, %s185, %s173, 128, 64, 4
        $region24: #{tpu_custom_call.1} parent=19 // pred_fallthru
          _
        // Predicated region
        $region25: #{tpu_custom_call.1} parent=19 // pred_check
          %p191 = pneg %p82
        $region26: #{tpu_custom_call.1} parent=19 // pred_check_branch
          %193 = sbr.rel (%p191) target = $region28
        $region27: #{tpu_custom_call.1} parent=19 // pred_region
          %s194 = sand.u32 %s18, 1
          %s195 = scalar_lea.sflag [#allocation6], %s194
          %s196 = sand.u32 %s72, 1
          %s197 = smul.addr %s196, 64
          %s198 = scalar_lea.vmem [#allocation5], %s197
          %s199 = sadd.s32 %s26, 1
          %s201 = ssub.s32 1024, 1024
          %202 = vsyncadd %s195, %s201
          %s203 = smul.addr %s25, 32
          %s204 = sadd.s32 %s199, %s203
          %s205 = smul.addr %s204, 64
          %s206 = scalar_lea.hbm %s1, %s205
          %s207 = sshll.u32 %s198, 4
          %s208 = int_to_ptr.vmem [resolvable:$true] %s207
          %213 = dma.hbm_to_vmem [thread:$0]  %s206, 1024, %s208, %s195, 128, 64, 4
        $region28: #{tpu_custom_call.1} parent=19 // pred_fallthru
          _
      $region20: #{tpu_custom_call.1} parent=5 // pred_fallthru
        _
      %p214 = scmp.le.s32.totalorder 1, %s18
      %p215 = scmp.lt.s32.totalorder %s18, 3
      %p216 = pnand %p214, %p215
      %p217 = pneg %p216
      // Predicated region
      $region29: #{tpu_custom_call.1} parent=5 // pred_check
        _
      $region30: #{tpu_custom_call.1} parent=5 // pred_check_branch
        %219 = sbr.rel (%p216) target = $region32
      $region31: #{tpu_custom_call.1} parent=5 // pred_region
        %s220 = ssub.s32 %s18, 1
        %s221 = sand.u32 %s45, 1
        %s222 = scalar_lea.sflag [#allocation3], %s221
        %s223 = sand.u32 %s45, 1
        %s224 = smul.addr %s223, 64
        %s225 = scalar_lea.vmem [#allocation2], %s224
        // Predicated region
        $region33: #{tpu_custom_call.1} parent=31 // pred_check
          %p226 = pneg %p58
        $region34: #{tpu_custom_call.1} parent=31 // pred_check_branch
          %228 = sbr.rel (%p226) target = $region36
        $region35: #{tpu_custom_call.1} parent=31 // pred_region
          %229 = dma.done %s222, 1024
        $region36: #{tpu_custom_call.1} parent=31 // pred_fallthru
          _
        %s230 = sand.u32 %s23, 1
        %s231 = scalar_lea.sflag [#allocation6], %s230
        %s232 = sand.u32 %s75, 1
        %s233 = smul.addr %s232, 64
        %s234 = scalar_lea.vmem [#allocation5], %s233
        // Predicated region
        $region37: #{tpu_custom_call.1} parent=31 // pred_check
          %p235 = pneg %p88
        $region38: #{tpu_custom_call.1} parent=31 // pred_check_branch
          %237 = sbr.rel (%p235) target = $region40
        $region39: #{tpu_custom_call.1} parent=31 // pred_region
          %238 = dma.done %s231, 1024
        $region40: #{tpu_custom_call.1} parent=31 // pred_fallthru
          _
        // Predicated region
        $region41: #{tpu_custom_call.1} parent=31 // pred_check
          %p239 = pneg %p109
        $region42: #{tpu_custom_call.1} parent=31 // pred_check_branch
          %241 = sbr.rel (%p239) target = $region44
        $region43: #{tpu_custom_call.1} parent=31 // pred_region
          %242 = dma.done [#allocation6], 3072
        $region44: #{tpu_custom_call.1} parent=31 // pred_fallthru
          _
        %s243 = sand.u32 %s45, 1
        %s244 = scalar_lea.sflag [#allocation3], %s243
        %s245 = sand.u32 %s45, 1
        %s246 = smul.addr %s245, 64
        %s247 = scalar_lea.vmem [#allocation2], %s246
        %p248 = pneg %p58
        %p249 = pneg %p55
        %s250 = sand.u32 %s23, 1
        %s251 = scalar_lea.sflag [#allocation6], %s250
        %s252 = sand.u32 %s75, 1
        %s253 = smul.addr %s252, 64
        %s254 = scalar_lea.vmem [#allocation5], %s253
        %p255 = pneg %p88
        %p256 = pneg %p85
        %p257 = pneg %p109
        %p258 = pneg %p106
        %p259 = pneg %p137
        %p260 = pneg %p134
        %s261 = sand.u32 %s124, 1
        %s262 = scalar_lea.sflag [#allocation4], %s261
        %s263 = sand.u32 %s124, 1
        %s264 = smul.addr %s263, 48
        %s265 = scalar_lea.vmem [#allocation8], %s264
        %s266 = sadd.s32 %s28, 1
        %v268 = vld [vmem:[%s225] sm:$0xf]
        %v269 = vld [vmem:[%s225 + $0x4] sm:$0xf]
        %v270 = vld [vmem:[%s225 + $0x8] sm:$0xf]
        %v271 = vld [vmem:[%s225 + $0xc] sm:$0xf]
        %v272 = vld [vmem:[%s225 + $0x10] sm:$0xf]
        %v273 = vld [vmem:[%s225 + $0x14] sm:$0xf]
        %v274 = vld [vmem:[%s225 + $0x18] sm:$0xf]
        %v275 = vld [vmem:[%s225 + $0x1c] sm:$0xf]
        %v276 = vld [vmem:[%s225 + $0x20] sm:$0xf]
        %v277 = vld [vmem:[%s225 + $0x24] sm:$0xf]
        %v278 = vld [vmem:[%s225 + $0x28] sm:$0xf]
        %v279 = vld [vmem:[%s225 + $0x2c] sm:$0xf]
        %v280 = vld [vmem:[%s225 + $0x30] sm:$0xf]
        %v281 = vld [vmem:[%s225 + $0x34] sm:$0xf]
        %v282 = vld [vmem:[%s225 + $0x38] sm:$0xf]
        %v283 = vld [vmem:[%s225 + $0x3c] sm:$0xf]
        %v284 = vld [vmem:[%s234] sm:$0xf]
        %v285 = vld [vmem:[%s234 + $0x4] sm:$0xf]
        %v286 = vld [vmem:[%s234 + $0x8] sm:$0xf]
        %v287 = vld [vmem:[%s234 + $0xc] sm:$0xf]
        %v288 = vld [vmem:[%s234 + $0x10] sm:$0xf]
        %v289 = vld [vmem:[%s234 + $0x14] sm:$0xf]
        %v290 = vld [vmem:[%s234 + $0x18] sm:$0xf]
        %v291 = vld [vmem:[%s234 + $0x1c] sm:$0xf]
        %v292 = vld [vmem:[%s234 + $0x20] sm:$0xf]
        %v293 = vld [vmem:[%s234 + $0x24] sm:$0xf]
        %v294 = vld [vmem:[%s234 + $0x28] sm:$0xf]
        %v295 = vld [vmem:[%s234 + $0x2c] sm:$0xf]
        %v296 = vld [vmem:[%s234 + $0x30] sm:$0xf]
        %v297 = vld [vmem:[%s234 + $0x34] sm:$0xf]
        %v298 = vld [vmem:[%s234 + $0x38] sm:$0xf]
        %v299 = vld [vmem:[%s234 + $0x3c] sm:$0xf]
        %v316 = vunpack.c.l.b16 %v268
        %v317 = vunpack.c.l.b16 %v269
        %v318 = vunpack.c.l.b16 %v270
        %v319 = vunpack.c.l.b16 %v271
        %v320 = vunpack.c.l.b16 %v272
        %v321 = vunpack.c.l.b16 %v273
        %v322 = vunpack.c.l.b16 %v274
        %v323 = vunpack.c.l.b16 %v275
        %v324 = vunpack.c.l.b16 %v276
        %v325 = vunpack.c.l.b16 %v277
        %v326 = vunpack.c.l.b16 %v278
        %v327 = vunpack.c.l.b16 %v279
        %v328 = vunpack.c.l.b16 %v280
        %v329 = vunpack.c.l.b16 %v281
        %v330 = vunpack.c.l.b16 %v282
        %v331 = vunpack.c.l.b16 %v283
        %v332 = vpack.c.b16 %v317, %v316
        %v333 = vpack.c.b16 %v319, %v318
        %v334 = vpack.c.b16 %v321, %v320
        %v335 = vpack.c.b16 %v323, %v322
        %v336 = vpack.c.b16 %v325, %v324
        %v337 = vpack.c.b16 %v327, %v326
        %v338 = vpack.c.b16 %v329, %v328
        %v339 = vpack.c.b16 %v331, %v330
        %v364 = vunpack.c.l.b16 %v284
        %v365 = vunpack.c.l.b16 %v285
        %v366 = vunpack.c.l.b16 %v286
        %v367 = vunpack.c.l.b16 %v287
        %v368 = vunpack.c.l.b16 %v288
        %v369 = vunpack.c.l.b16 %v289
        %v370 = vunpack.c.l.b16 %v290
        %v371 = vunpack.c.l.b16 %v291
        %v372 = vunpack.c.l.b16 %v292
        %v373 = vunpack.c.l.b16 %v293
        %v374 = vunpack.c.l.b16 %v294
        %v375 = vunpack.c.l.b16 %v295
        %v376 = vunpack.c.l.b16 %v296
        %v377 = vunpack.c.l.b16 %v297
        %v378 = vunpack.c.l.b16 %v298
        %v379 = vunpack.c.l.b16 %v299
        %v380 = vpack.c.b16 %v365, %v364
        %v381 = vpack.c.b16 %v367, %v366
        %v382 = vpack.c.b16 %v369, %v368
        %v383 = vpack.c.b16 %v371, %v370
        %v384 = vpack.c.b16 %v373, %v372
        %v385 = vpack.c.b16 %v375, %v374
        %v386 = vpack.c.b16 %v377, %v376
        %v387 = vpack.c.b16 %v379, %v378
        %v388 = vld [vmem:[#allocation7] sm:$0xf]
        %v389 = vld [vmem:[#allocation7 + $0x4] sm:$0xf]
        %v390 = vld [vmem:[#allocation7 + $0x8] sm:$0xf]
        %v391 = vld [vmem:[#allocation7 + $0xc] sm:$0xf]
        %v392 = vld [vmem:[#allocation7 + $0x10] sm:$0xf]
        %v393 = vld [vmem:[#allocation7 + $0x14] sm:$0xf]
        %v394 = vld [vmem:[#allocation7 + $0x18] sm:$0xf]
        %v395 = vld [vmem:[#allocation7 + $0x1c] sm:$0xf]
        %v396 = vld [vmem:[#allocation7 + $0x20] sm:$0xf]
        %v397 = vld [vmem:[#allocation7 + $0x24] sm:$0xf]
        %v398 = vld [vmem:[#allocation7 + $0x28] sm:$0xf]
        %v399 = vld [vmem:[#allocation7 + $0x2c] sm:$0xf]
        %s400 = scalar_lea.vmem [#allocation7], 48
        %v401 = vld [vmem:[%s400] sm:$0xf]
        %v402 = vld [vmem:[%s400 + $0x4] sm:$0xf]
        %v403 = vld [vmem:[%s400 + $0x8] sm:$0xf]
        %v404 = vld [vmem:[%s400 + $0xc] sm:$0xf]
        %v405 = vld [vmem:[%s400 + $0x10] sm:$0xf]
        %v406 = vld [vmem:[%s400 + $0x14] sm:$0xf]
        %v407 = vld [vmem:[%s400 + $0x18] sm:$0xf]
        %v408 = vld [vmem:[%s400 + $0x1c] sm:$0xf]
        %v409 = vld [vmem:[%s400 + $0x20] sm:$0xf]
        %v410 = vld [vmem:[%s400 + $0x24] sm:$0xf]
        %v411 = vld [vmem:[%s400 + $0x28] sm:$0xf]
        %v412 = vld [vmem:[%s400 + $0x2c] sm:$0xf]
        %v425 = vunpack.c.l.b16 %v401
        %v426 = vunpack.c.l.b16 %v402
        %v427 = vunpack.c.l.b16 %v403
        %v428 = vunpack.c.l.b16 %v404
        %v429 = vunpack.c.l.b16 %v405
        %v430 = vunpack.c.l.b16 %v406
        %v431 = vunpack.c.l.b16 %v407
        %v432 = vunpack.c.l.b16 %v408
        %v433 = vunpack.c.l.b16 %v409
        %v434 = vunpack.c.l.b16 %v410
        %v435 = vunpack.c.l.b16 %v411
        %v436 = vunpack.c.l.b16 %v412
        %v437 = vpack.c.b16 %v426, %v425
        %v438 = vpack.c.b16 %v428, %v427
        %v439 = vpack.c.b16 %v430, %v429
        %v440 = vpack.c.b16 %v432, %v431
        %v441 = vpack.c.b16 %v434, %v433
        %v442 = vpack.c.b16 %v436, %v435
        %449 = vrot.lane.b32.xlu0 %v332, 127
        %v450 = vpop.permute.xlu0 %449
        %451 = vrot.lane.b32.xlu0 %v380, 127
        %v452 = vpop.permute.xlu0 %451
        %453 = vrot.lane.b32.xlu0 %v333, 127
        %v454 = vpop.permute.xlu0 %453
        %455 = vrot.lane.b32.xlu0 %v381, 127
        %v456 = vpop.permute.xlu0 %455
        %457 = vrot.lane.b32.xlu0 %v334, 127
        %v458 = vpop.permute.xlu0 %457
        %459 = vrot.lane.b32.xlu0 %v382, 127
        %v460 = vpop.permute.xlu0 %459
        %461 = vrot.lane.b32.xlu0 %v335, 127
        %v462 = vpop.permute.xlu0 %461
        %463 = vrot.lane.b32.xlu0 %v383, 127
        %v464 = vpop.permute.xlu0 %463
        %465 = vrot.lane.b32.xlu0 %v336, 127
        %v466 = vpop.permute.xlu0 %465
        %467 = vrot.lane.b32.xlu0 %v384, 127
        %v468 = vpop.permute.xlu0 %467
        %469 = vrot.lane.b32.xlu0 %v337, 127
        %v470 = vpop.permute.xlu0 %469
        %471 = vrot.lane.b32.xlu0 %v385, 127
        %v472 = vpop.permute.xlu0 %471
        %473 = vrot.lane.b32.xlu0 %v338, 127
        %v474 = vpop.permute.xlu0 %473
        %475 = vrot.lane.b32.xlu0 %v386, 127
        %v476 = vpop.permute.xlu0 %475
        %477 = vrot.lane.b32.xlu0 %v339, 127
        %v478 = vpop.permute.xlu0 %477
        %479 = vrot.lane.b32.xlu0 %v387, 127
        %v480 = vpop.permute.xlu0 %479
        %vm481 = vcmask 1039360
        %v482 = vsel %vm481, %v450, %v452
        %v483 = vsel %vm481, %v454, %v456
        %v484 = vsel %vm481, %v458, %v460
        %v485 = vsel %vm481, %v462, %v464
        %v486 = vsel %vm481, %v466, %v468
        %v487 = vsel %vm481, %v470, %v472
        %v488 = vsel %vm481, %v474, %v476
        %v489 = vsel %vm481, %v478, %v480
        %498 = vmatprep.subr.bf16.mxu0 0
        %499 = vmatpush1.bf16.msra.mxu0 %v482
        %500 = vmatprep.subr.bf16.mxu0 0
        %501 = vmatpush1.bf16.msra.mxu0 %v483
        %502 = vmatprep.subr.bf16.mxu0 0
        %503 = vmatpush1.bf16.msra.mxu0 %v484
        %504 = vmatprep.subr.bf16.mxu0 0
        %505 = vmatpush1.bf16.msra.mxu0 %v485
        %506 = vmatprep.subr.bf16.mxu0 0
        %507 = vmatpush1.bf16.msra.mxu0 %v486
        %508 = vmatprep.subr.bf16.mxu0 0
        %509 = vmatpush1.bf16.msra.mxu0 %v487
        %510 = vmatprep.subr.bf16.mxu0 0
        %511 = vmatpush1.bf16.msra.mxu0 %v488
        %512 = vmatprep.subr.bf16.mxu0 0
        %513 = vmatpush1.bf16.msra.mxu0 %v489
        %514 = vmatprep.subr.bf16.mxu0 0
        %515 = vmatpush1.bf16.msra.mxu0 0
        %516 = vmatprep.subr.bf16.mxu0 0
        %517 = vmatpush1.bf16.msra.mxu0 0
        %518 = vmatprep.subr.bf16.mxu0 0
        %519 = vmatpush1.bf16.msra.mxu0 0
        %520 = vmatprep.subr.bf16.mxu0 0
        %521 = vmatpush1.bf16.msra.mxu0 0
        %522 = vmatprep.subr.bf16.mxu0 0
        %523 = vmatpush1.bf16.msra.mxu0 0
        %524 = vmatprep.subr.bf16.mxu0 0
        %525 = vmatpush1.bf16.msra.mxu0 0
        %526 = vmatprep.subr.bf16.mxu0 0
        %527 = vmatpush1.bf16.msra.mxu0 0
        %528 = vmatprep.subr.bf16.mxu0 0
        %529 = vmatpush1.bf16.msra.mxu0 0
        %530 = vmatprep.mubr.bf16.mxu0 0
        %531 = vmatmul.mubr.bf16.gmra.mrb[0].mxu0 %v437
        %v532 = vpop.f32.mrb[0].mxu0
        %v533 = vadd.f32 0.0, %v532
        %v534 = vpop.f32.mrb[0].mxu0
        %v535 = vpop.f32.mrb[0].mxu0
        %v536 = vadd.f32 0.0, %v535
        %v537 = vpop.f32.mrb[0].mxu0
        %538 = vmatprep.mubr.bf16.mxu0 0
        %539 = vmatmul.mubr.bf16.gmra.mrb[0].mxu0 %v438
        %v540 = vpop.f32.mrb[0].mxu0
        %v541 = vadd.f32 0.0, %v540
        %v542 = vpop.f32.mrb[0].mxu0
        %v543 = vpop.f32.mrb[0].mxu0
        %v544 = vadd.f32 0.0, %v543
        %v545 = vpop.f32.mrb[0].mxu0
        %546 = vmatprep.mubr.bf16.mxu0 0
        %547 = vmatmul.mubr.bf16.gmra.mrb[0].mxu0 %v439
        %v548 = vpop.f32.mrb[0].mxu0
        %v549 = vadd.f32 0.0, %v548
        %v550 = vpop.f32.mrb[0].mxu0
        %v551 = vpop.f32.mrb[0].mxu0
        %v552 = vadd.f32 0.0, %v551
        %v553 = vpop.f32.mrb[0].mxu0
        %554 = vmatprep.mubr.bf16.mxu0 0
        %555 = vmatmul.mubr.bf16.gmra.mrb[0].mxu0 %v440
        %v556 = vpop.f32.mrb[0].mxu0
        %v557 = vadd.f32 0.0, %v556
        %v558 = vpop.f32.mrb[0].mxu0
        %v559 = vpop.f32.mrb[0].mxu0
        %v560 = vadd.f32 0.0, %v559
        %v561 = vpop.f32.mrb[0].mxu0
        %562 = vmatprep.mubr.bf16.mxu0 0
        %563 = vmatmul.mubr.bf16.gmra.mrb[0].mxu0 %v441
        %v564 = vpop.f32.mrb[0].mxu0
        %v565 = vadd.f32 0.0, %v564
        %v566 = vpop.f32.mrb[0].mxu0
        %v567 = vpop.f32.mrb[0].mxu0
        %v568 = vadd.f32 0.0, %v567
        %v569 = vpop.f32.mrb[0].mxu0
        %570 = vmatprep.mubr.bf16.mxu0 0
        %571 = vmatmul.mubr.bf16.gmra.mrb[0].mxu0 %v442
        %v572 = vpop.f32.mrb[0].mxu0
        %v573 = vadd.f32 0.0, %v572
        %v574 = vpop.f32.mrb[0].mxu0
        %v575 = vpop.f32.mrb[0].mxu0
        %v576 = vadd.f32 0.0, %v575
        %v577 = vpop.f32.mrb[0].mxu0
        %578 = vdwg.mxu0
        %v591 = vunpack.c.l.b16 %v388
        %v592 = vunpack.c.l.b16 %v389
        %v593 = vunpack.c.l.b16 %v390
        %v594 = vunpack.c.l.b16 %v391
        %v595 = vunpack.c.l.b16 %v392
        %v596 = vunpack.c.l.b16 %v393
        %v597 = vunpack.c.l.b16 %v394
        %v598 = vunpack.c.l.b16 %v395
        %v599 = vunpack.c.l.b16 %v396
        %v600 = vunpack.c.l.b16 %v397
        %v601 = vunpack.c.l.b16 %v398
        %v602 = vunpack.c.l.b16 %v399
        %v603 = vpack.c.b16 %v592, %v591
        %v604 = vpack.c.b16 %v594, %v593
        %v605 = vpack.c.b16 %v596, %v595
        %v606 = vpack.c.b16 %v598, %v597
        %v607 = vpack.c.b16 %v600, %v599
        %v608 = vpack.c.b16 %v602, %v601
        %615 = vmatprep.subr.bf16.mxu0 0
        %616 = vmatpush1.bf16.msra.mxu0 %v332
        %617 = vmatprep.subr.bf16.mxu0 0
        %618 = vmatpush1.bf16.msra.mxu0 %v333
        %619 = vmatprep.subr.bf16.mxu0 0
        %620 = vmatpush1.bf16.msra.mxu0 %v334
        %621 = vmatprep.subr.bf16.mxu0 0
        %622 = vmatpush1.bf16.msra.mxu0 %v335
        %623 = vmatprep.subr.bf16.mxu0 0
        %624 = vmatpush1.bf16.msra.mxu0 %v336
        %625 = vmatprep.subr.bf16.mxu0 0
        %626 = vmatpush1.bf16.msra.mxu0 %v337
        %627 = vmatprep.subr.bf16.mxu0 0
        %628 = vmatpush1.bf16.msra.mxu0 %v338
        %629 = vmatprep.subr.bf16.mxu0 0
        %630 = vmatpush1.bf16.msra.mxu0 %v339
        %631 = vmatprep.subr.bf16.mxu0 0
        %632 = vmatpush1.bf16.msra.mxu0 0
        %633 = vmatprep.subr.bf16.mxu0 0
        %634 = vmatpush1.bf16.msra.mxu0 0
        %635 = vmatprep.subr.bf16.mxu0 0
        %636 = vmatpush1.bf16.msra.mxu0 0
        %637 = vmatprep.subr.bf16.mxu0 0
        %638 = vmatpush1.bf16.msra.mxu0 0
        %639 = vmatprep.subr.bf16.mxu0 0
        %640 = vmatpush1.bf16.msra.mxu0 0
        %641 = vmatprep.subr.bf16.mxu0 0
        %642 = vmatpush1.bf16.msra.mxu0 0
        %643 = vmatprep.subr.bf16.mxu0 0
        %644 = vmatpush1.bf16.msra.mxu0 0
        %645 = vmatprep.subr.bf16.mxu0 0
        %646 = vmatpush1.bf16.msra.mxu0 0
        %647 = vmatprep.mubr.bf16.mxu0 0
        %648 = vmatmul.mubr.bf16.gmra.mrb[0].mxu0 %v603
        %v649 = vpop.f32.mrb[0].mxu0
        %v650 = vadd.f32 %v533, %v649
        %v651 = vpop.f32.mrb[0].mxu0
        %v652 = vpop.f32.mrb[0].mxu0
        %v653 = vadd.f32 %v536, %v652
        %v654 = vpop.f32.mrb[0].mxu0
        %655 = vmatprep.mubr.bf16.mxu0 0
        %656 = vmatmul.mubr.bf16.gmra.mrb[0].mxu0 %v604
        %v657 = vpop.f32.mrb[0].mxu0
        %v658 = vadd.f32 %v541, %v657
        %v659 = vpop.f32.mrb[0].mxu0
        %v660 = vpop.f32.mrb[0].mxu0
        %v661 = vadd.f32 %v544, %v660
        %v662 = vpop.f32.mrb[0].mxu0
        %663 = vmatprep.mubr.bf16.mxu0 0
        %664 = vmatmul.mubr.bf16.gmra.mrb[0].mxu0 %v605
        %v665 = vpop.f32.mrb[0].mxu0
        %v666 = vadd.f32 %v549, %v665
        %v667 = vpop.f32.mrb[0].mxu0
        %v668 = vpop.f32.mrb[0].mxu0
        %v669 = vadd.f32 %v552, %v668
        %v670 = vpop.f32.mrb[0].mxu0
        %671 = vmatprep.mubr.bf16.mxu0 0
        %672 = vmatmul.mubr.bf16.gmra.mrb[0].mxu0 %v606
        %v673 = vpop.f32.mrb[0].mxu0
        %v674 = vadd.f32 %v557, %v673
        %v675 = vpop.f32.mrb[0].mxu0
        %v676 = vpop.f32.mrb[0].mxu0
        %v677 = vadd.f32 %v560, %v676
        %v678 = vpop.f32.mrb[0].mxu0
        %679 = vmatprep.mubr.bf16.mxu0 0
        %680 = vmatmul.mubr.bf16.gmra.mrb[0].mxu0 %v607
        %v681 = vpop.f32.mrb[0].mxu0
        %v682 = vadd.f32 %v565, %v681
        %v683 = vpop.f32.mrb[0].mxu0
        %v684 = vpop.f32.mrb[0].mxu0
        %v685 = vadd.f32 %v568, %v684
        %v686 = vpop.f32.mrb[0].mxu0
        %687 = vmatprep.mubr.bf16.mxu0 0
        %688 = vmatmul.mubr.bf16.gmra.mrb[0].mxu0 %v608
        %v689 = vpop.f32.mrb[0].mxu0
        %v690 = vadd.f32 %v573, %v689
        %v691 = vpop.f32.mrb[0].mxu0
        %v692 = vpop.f32.mrb[0].mxu0
        %v693 = vadd.f32 %v576, %v692
        %v694 = vpop.f32.mrb[0].mxu0
        %695 = vdwg.mxu0
        %s696 = scalar_lea.vmem [#allocation7], 96
        %v697 = vld [vmem:[%s696] sm:$0xf]
        %v698 = vld [vmem:[%s696 + $0x4] sm:$0xf]
        %v699 = vld [vmem:[%s696 + $0x8] sm:$0xf]
        %v700 = vld [vmem:[%s696 + $0xc] sm:$0xf]
        %v701 = vld [vmem:[%s696 + $0x10] sm:$0xf]
        %v702 = vld [vmem:[%s696 + $0x14] sm:$0xf]
        %v703 = vld [vmem:[%s696 + $0x18] sm:$0xf]
        %v704 = vld [vmem:[%s696 + $0x1c] sm:$0xf]
        %v705 = vld [vmem:[%s696 + $0x20] sm:$0xf]
        %v706 = vld [vmem:[%s696 + $0x24] sm:$0xf]
        %v707 = vld [vmem:[%s696 + $0x28] sm:$0xf]
        %v708 = vld [vmem:[%s696 + $0x2c] sm:$0xf]
        %v721 = vunpack.c.l.b16 %v697
        %v722 = vunpack.c.l.b16 %v698
        %v723 = vunpack.c.l.b16 %v699
        %v724 = vunpack.c.l.b16 %v700
        %v725 = vunpack.c.l.b16 %v701
        %v726 = vunpack.c.l.b16 %v702
        %v727 = vunpack.c.l.b16 %v703
        %v728 = vunpack.c.l.b16 %v704
        %v729 = vunpack.c.l.b16 %v705
        %v730 = vunpack.c.l.b16 %v706
        %v731 = vunpack.c.l.b16 %v707
        %v732 = vunpack.c.l.b16 %v708
        %v733 = vpack.c.b16 %v722, %v721
        %v734 = vpack.c.b16 %v724, %v723
        %v735 = vpack.c.b16 %v726, %v725
        %v736 = vpack.c.b16 %v728, %v727
        %v737 = vpack.c.b16 %v730, %v729
        %v738 = vpack.c.b16 %v732, %v731
        %745 = vrot.lane.b32.xlu0 %v332, 126
        %v746 = vpop.permute.xlu0 %745
        %747 = vrot.lane.b32.xlu0 %v380, 126
        %v748 = vpop.permute.xlu0 %747
        %749 = vrot.lane.b32.xlu0 %v333, 126
        %v750 = vpop.permute.xlu0 %749
        %751 = vrot.lane.b32.xlu0 %v381, 126
        %v752 = vpop.permute.xlu0 %751
        %753 = vrot.lane.b32.xlu0 %v334, 126
        %v754 = vpop.permute.xlu0 %753
        %755 = vrot.lane.b32.xlu0 %v382, 126
        %v756 = vpop.permute.xlu0 %755
        %757 = vrot.lane.b32.xlu0 %v335, 126
        %v758 = vpop.permute.xlu0 %757
        %759 = vrot.lane.b32.xlu0 %v383, 126
        %v760 = vpop.permute.xlu0 %759
        %761 = vrot.lane.b32.xlu0 %v336, 126
        %v762 = vpop.permute.xlu0 %761
        %763 = vrot.lane.b32.xlu0 %v384, 126
        %v764 = vpop.permute.xlu0 %763
        %765 = vrot.lane.b32.xlu0 %v337, 126
        %v766 = vpop.permute.xlu0 %765
        %767 = vrot.lane.b32.xlu0 %v385, 126
        %v768 = vpop.permute.xlu0 %767
        %769 = vrot.lane.b32.xlu0 %v338, 126
        %v770 = vpop.permute.xlu0 %769
        %771 = vrot.lane.b32.xlu0 %v386, 126
        %v772 = vpop.permute.xlu0 %771
        %773 = vrot.lane.b32.xlu0 %v339, 126
        %v774 = vpop.permute.xlu0 %773
        %775 = vrot.lane.b32.xlu0 %v387, 126
        %v776 = vpop.permute.xlu0 %775
        %vm777 = vcmask 1031168
        %v778 = vsel %vm777, %v746, %v748
        %v779 = vsel %vm777, %v750, %v752
        %v780 = vsel %vm777, %v754, %v756
        %v781 = vsel %vm777, %v758, %v760
        %v782 = vsel %vm777, %v762, %v764
        %v783 = vsel %vm777, %v766, %v768
        %v784 = vsel %vm777, %v770, %v772
        %v785 = vsel %vm777, %v774, %v776
        %794 = vmatprep.subr.bf16.mxu0 0
        %795 = vmatpush1.bf16.msra.mxu0 %v778
        %796 = vmatprep.subr.bf16.mxu0 0
        %797 = vmatpush1.bf16.msra.mxu0 %v779
        %798 = vmatprep.subr.bf16.mxu0 0
        %799 = vmatpush1.bf16.msra.mxu0 %v780
        %800 = vmatprep.subr.bf16.mxu0 0
        %801 = vmatpush1.bf16.msra.mxu0 %v781
        %802 = vmatprep.subr.bf16.mxu0 0
        %803 = vmatpush1.bf16.msra.mxu0 %v782
        %804 = vmatprep.subr.bf16.mxu0 0
        %805 = vmatpush1.bf16.msra.mxu0 %v783
        %806 = vmatprep.subr.bf16.mxu0 0
        %807 = vmatpush1.bf16.msra.mxu0 %v784
        %808 = vmatprep.subr.bf16.mxu0 0
        %809 = vmatpush1.bf16.msra.mxu0 %v785
        %810 = vmatprep.subr.bf16.mxu0 0
        %811 = vmatpush1.bf16.msra.mxu0 0
        %812 = vmatprep.subr.bf16.mxu0 0
        %813 = vmatpush1.bf16.msra.mxu0 0
        %814 = vmatprep.subr.bf16.mxu0 0
        %815 = vmatpush1.bf16.msra.mxu0 0
        %816 = vmatprep.subr.bf16.mxu0 0
        %817 = vmatpush1.bf16.msra.mxu0 0
        %818 = vmatprep.subr.bf16.mxu0 0
        %819 = vmatpush1.bf16.msra.mxu0 0
        %820 = vmatprep.subr.bf16.mxu0 0
        %821 = vmatpush1.bf16.msra.mxu0 0
        %822 = vmatprep.subr.bf16.mxu0 0
        %823 = vmatpush1.bf16.msra.mxu0 0
        %824 = vmatprep.subr.bf16.mxu0 0
        %825 = vmatpush1.bf16.msra.mxu0 0
        %826 = vmatprep.mubr.bf16.mxu0 0
        %827 = vmatmul.mubr.bf16.gmra.mrb[0].mxu0 %v733
        %v828 = vpop.f32.mrb[0].mxu0
        %v829 = vadd.f32 0.0, %v828
        %v830 = vpop.f32.mrb[0].mxu0
        %v831 = vpop.f32.mrb[0].mxu0
        %v832 = vadd.f32 0.0, %v831
        %v833 = vpop.f32.mrb[0].mxu0
        %834 = vmatprep.mubr.bf16.mxu0 0
        %835 = vmatmul.mubr.bf16.gmra.mrb[0].mxu0 %v734
        %v836 = vpop.f32.mrb[0].mxu0
        %v837 = vadd.f32 0.0, %v836
        %v838 = vpop.f32.mrb[0].mxu0
        %v839 = vpop.f32.mrb[0].mxu0
        %v840 = vadd.f32 0.0, %v839
        %v841 = vpop.f32.mrb[0].mxu0
        %842 = vmatprep.mubr.bf16.mxu0 0
        %843 = vmatmul.mubr.bf16.gmra.mrb[0].mxu0 %v735
        %v844 = vpop.f32.mrb[0].mxu0
        %v845 = vadd.f32 0.0, %v844
        %v846 = vpop.f32.mrb[0].mxu0
        %v847 = vpop.f32.mrb[0].mxu0
        %v848 = vadd.f32 0.0, %v847
        %v849 = vpop.f32.mrb[0].mxu0
        %850 = vmatprep.mubr.bf16.mxu0 0
        %851 = vmatmul.mubr.bf16.gmra.mrb[0].mxu0 %v736
        %v852 = vpop.f32.mrb[0].mxu0
        %v853 = vadd.f32 0.0, %v852
        %v854 = vpop.f32.mrb[0].mxu0
        %v855 = vpop.f32.mrb[0].mxu0
        %v856 = vadd.f32 0.0, %v855
        %v857 = vpop.f32.mrb[0].mxu0
        %858 = vmatprep.mubr.bf16.mxu0 0
        %859 = vmatmul.mubr.bf16.gmra.mrb[0].mxu0 %v737
        %v860 = vpop.f32.mrb[0].mxu0
        %v861 = vadd.f32 0.0, %v860
        %v862 = vpop.f32.mrb[0].mxu0
        %v863 = vpop.f32.mrb[0].mxu0
        %v864 = vadd.f32 0.0, %v863
        %v865 = vpop.f32.mrb[0].mxu0
        %866 = vmatprep.mubr.bf16.mxu0 0
        %867 = vmatmul.mubr.bf16.gmra.mrb[0].mxu0 %v738
        %v868 = vpop.f32.mrb[0].mxu0
        %v869 = vadd.f32 0.0, %v868
        %v870 = vpop.f32.mrb[0].mxu0
        %v871 = vpop.f32.mrb[0].mxu0
        %v872 = vadd.f32 0.0, %v871
        %v873 = vpop.f32.mrb[0].mxu0
        %874 = vdwg.mxu0
        %v875 = vadd.f32 %v650, %v829
        %v876 = vadd.f32 %v653, %v832
        %v877 = vadd.f32 %v658, %v837
        %v878 = vadd.f32 %v661, %v840
        %v879 = vadd.f32 %v666, %v845
        %v880 = vadd.f32 %v669, %v848
        %v881 = vadd.f32 %v674, %v853
        %v882 = vadd.f32 %v677, %v856
        %v883 = vadd.f32 %v682, %v861
        %v884 = vadd.f32 %v685, %v864
        %v885 = vadd.f32 %v690, %v869
        %v886 = vadd.f32 %v693, %v872
        %s887 = scalar_lea.vmem [#allocation7], 144
        %v888 = vld [vmem:[%s887] sm:$0xf]
        %v889 = vld [vmem:[%s887 + $0x4] sm:$0xf]
        %v890 = vld [vmem:[%s887 + $0x8] sm:$0xf]
        %v891 = vld [vmem:[%s887 + $0xc] sm:$0xf]
        %v892 = vld [vmem:[%s887 + $0x10] sm:$0xf]
        %v893 = vld [vmem:[%s887 + $0x14] sm:$0xf]
        %v894 = vld [vmem:[%s887 + $0x18] sm:$0xf]
        %v895 = vld [vmem:[%s887 + $0x1c] sm:$0xf]
        %v896 = vld [vmem:[%s887 + $0x20] sm:$0xf]
        %v897 = vld [vmem:[%s887 + $0x24] sm:$0xf]
        %v898 = vld [vmem:[%s887 + $0x28] sm:$0xf]
        %v899 = vld [vmem:[%s887 + $0x2c] sm:$0xf]
        %v912 = vunpack.c.l.b16 %v888
        %v913 = vunpack.c.l.b16 %v889
        %v914 = vunpack.c.l.b16 %v890
        %v915 = vunpack.c.l.b16 %v891
        %v916 = vunpack.c.l.b16 %v892
        %v917 = vunpack.c.l.b16 %v893
        %v918 = vunpack.c.l.b16 %v894
        %v919 = vunpack.c.l.b16 %v895
        %v920 = vunpack.c.l.b16 %v896
        %v921 = vunpack.c.l.b16 %v897
        %v922 = vunpack.c.l.b16 %v898
        %v923 = vunpack.c.l.b16 %v899
        %v924 = vpack.c.b16 %v913, %v912
        %v925 = vpack.c.b16 %v915, %v914
        %v926 = vpack.c.b16 %v917, %v916
        %v927 = vpack.c.b16 %v919, %v918
        %v928 = vpack.c.b16 %v921, %v920
        %v929 = vpack.c.b16 %v923, %v922
        %936 = vrot.lane.b32.xlu0 %v332, 125
        %v937 = vpop.permute.xlu0 %936
        %938 = vrot.lane.b32.xlu0 %v380, 125
        %v939 = vpop.permute.xlu0 %938
        %940 = vrot.lane.b32.xlu0 %v333, 125
        %v941 = vpop.permute.xlu0 %940
        %942 = vrot.lane.b32.xlu0 %v381, 125
        %v943 = vpop.permute.xlu0 %942
        %944 = vrot.lane.b32.xlu0 %v334, 125
        %v945 = vpop.permute.xlu0 %944
        %946 = vrot.lane.b32.xlu0 %v382, 125
        %v947 = vpop.permute.xlu0 %946
        %948 = vrot.lane.b32.xlu0 %v335, 125
        %v949 = vpop.permute.xlu0 %948
        %950 = vrot.lane.b32.xlu0 %v383, 125
        %v951 = vpop.permute.xlu0 %950
        %952 = vrot.lane.b32.xlu0 %v336, 125
        %v953 = vpop.permute.xlu0 %952
        %954 = vrot.lane.b32.xlu0 %v384, 125
        %v955 = vpop.permute.xlu0 %954
        %956 = vrot.lane.b32.xlu0 %v337, 125
        %v957 = vpop.permute.xlu0 %956
        %958 = vrot.lane.b32.xlu0 %v385, 125
        %v959 = vpop.permute.xlu0 %958
        %960 = vrot.lane.b32.xlu0 %v338, 125
        %v961 = vpop.permute.xlu0 %960
        %962 = vrot.lane.b32.xlu0 %v386, 125
        %v963 = vpop.permute.xlu0 %962
        %964 = vrot.lane.b32.xlu0 %v339, 125
        %v965 = vpop.permute.xlu0 %964
        %966 = vrot.lane.b32.xlu0 %v387, 125
        %v967 = vpop.permute.xlu0 %966
        %vm968 = vcmask 1022976
        %v969 = vsel %vm968, %v937, %v939
        %v970 = vsel %vm968, %v941, %v943
        %v971 = vsel %vm968, %v945, %v947
        %v972 = vsel %vm968, %v949, %v951
        %v973 = vsel %vm968, %v953, %v955
        %v974 = vsel %vm968, %v957, %v959
        %v975 = vsel %vm968, %v961, %v963
        %v976 = vsel %vm968, %v965, %v967
        %985 = vmatprep.subr.bf16.mxu0 0
        %986 = vmatpush1.bf16.msra.mxu0 %v969
        %987 = vmatprep.subr.bf16.mxu0 0
        %988 = vmatpush1.bf16.msra.mxu0 %v970
        %989 = vmatprep.subr.bf16.mxu0 0
        %990 = vmatpush1.bf16.msra.mxu0 %v971
        %991 = vmatprep.subr.bf16.mxu0 0
        %992 = vmatpush1.bf16.msra.mxu0 %v972
        %993 = vmatprep.subr.bf16.mxu0 0
        %994 = vmatpush1.bf16.msra.mxu0 %v973
        %995 = vmatprep.subr.bf16.mxu0 0
        %996 = vmatpush1.bf16.msra.mxu0 %v974
        %997 = vmatprep.subr.bf16.mxu0 0
        %998 = vmatpush1.bf16.msra.mxu0 %v975
        %999 = vmatprep.subr.bf16.mxu0 0
        %1000 = vmatpush1.bf16.msra.mxu0 %v976
        %1001 = vmatprep.subr.bf16.mxu0 0
        %1002 = vmatpush1.bf16.msra.mxu0 0
        %1003 = vmatprep.subr.bf16.mxu0 0
        %1004 = vmatpush1.bf16.msra.mxu0 0
        %1005 = vmatprep.subr.bf16.mxu0 0
        %1006 = vmatpush1.bf16.msra.mxu0 0
        %1007 = vmatprep.subr.bf16.mxu0 0
        %1008 = vmatpush1.bf16.msra.mxu0 0
        %1009 = vmatprep.subr.bf16.mxu0 0
        %1010 = vmatpush1.bf16.msra.mxu0 0
        %1011 = vmatprep.subr.bf16.mxu0 0
        %1012 = vmatpush1.bf16.msra.mxu0 0
        %1013 = vmatprep.subr.bf16.mxu0 0
        %1014 = vmatpush1.bf16.msra.mxu0 0
        %1015 = vmatprep.subr.bf16.mxu0 0
        %1016 = vmatpush1.bf16.msra.mxu0 0
        %1017 = vmatprep.mubr.bf16.mxu0 0
        %1018 = vmatmul.mubr.bf16.gmra.mrb[0].mxu0 %v924
        %v1019 = vpop.f32.mrb[0].mxu0
        %v1020 = vadd.f32 0.0, %v1019
        %v1021 = vpop.f32.mrb[0].mxu0
        %v1022 = vpop.f32.mrb[0].mxu0
        %v1023 = vadd.f32 0.0, %v1022
        %v1024 = vpop.f32.mrb[0].mxu0
        %1025 = vmatprep.mubr.bf16.mxu0 0
        %1026 = vmatmul.mubr.bf16.gmra.mrb[0].mxu0 %v925
        %v1027 = vpop.f32.mrb[0].mxu0
        %v1028 = vadd.f32 0.0, %v1027
        %v1029 = vpop.f32.mrb[0].mxu0
        %v1030 = vpop.f32.mrb[0].mxu0
        %v1031 = vadd.f32 0.0, %v1030
        %v1032 = vpop.f32.mrb[0].mxu0
        %1033 = vmatprep.mubr.bf16.mxu0 0
        %1034 = vmatmul.mubr.bf16.gmra.mrb[0].mxu0 %v926
        %v1035 = vpop.f32.mrb[0].mxu0
        %v1036 = vadd.f32 0.0, %v1035
        %v1037 = vpop.f32.mrb[0].mxu0
        %v1038 = vpop.f32.mrb[0].mxu0
        %v1039 = vadd.f32 0.0, %v1038
        %v1040 = vpop.f32.mrb[0].mxu0
        %1041 = vmatprep.mubr.bf16.mxu0 0
        %1042 = vmatmul.mubr.bf16.gmra.mrb[0].mxu0 %v927
        %v1043 = vpop.f32.mrb[0].mxu0
        %v1044 = vadd.f32 0.0, %v1043
        %v1045 = vpop.f32.mrb[0].mxu0
        %v1046 = vpop.f32.mrb[0].mxu0
        %v1047 = vadd.f32 0.0, %v1046
        %v1048 = vpop.f32.mrb[0].mxu0
        %1049 = vmatprep.mubr.bf16.mxu0 0
        %1050 = vmatmul.mubr.bf16.gmra.mrb[0].mxu0 %v928
        %v1051 = vpop.f32.mrb[0].mxu0
        %v1052 = vadd.f32 0.0, %v1051
        %v1053 = vpop.f32.mrb[0].mxu0
        %v1054 = vpop.f32.mrb[0].mxu0
        %v1055 = vadd.f32 0.0, %v1054
        %v1056 = vpop.f32.mrb[0].mxu0
        %1057 = vmatprep.mubr.bf16.mxu0 0
        %1058 = vmatmul.mubr.bf16.gmra.mrb[0].mxu0 %v929
        %v1059 = vpop.f32.mrb[0].mxu0
        %v1060 = vadd.f32 0.0, %v1059
        %v1061 = vpop.f32.mrb[0].mxu0
        %v1062 = vpop.f32.mrb[0].mxu0
        %v1063 = vadd.f32 0.0, %v1062
        %v1064 = vpop.f32.mrb[0].mxu0
        %1065 = vdwg.mxu0
        %v1066 = vadd.f32 %v875, %v1020
        %v1067 = vadd.f32 %v876, %v1023
        %v1068 = vadd.f32 %v877, %v1028
        %v1069 = vadd.f32 %v878, %v1031
        %v1070 = vadd.f32 %v879, %v1036
        %v1071 = vadd.f32 %v880, %v1039
        %v1072 = vadd.f32 %v881, %v1044
        %v1073 = vadd.f32 %v882, %v1047
        %v1074 = vadd.f32 %v883, %v1052
        %v1075 = vadd.f32 %v884, %v1055
        %v1076 = vadd.f32 %v885, %v1060
        %v1077 = vadd.f32 %v886, %v1063
        %v1078 = vmul.f32 %v1066, %v1066
        %v1079 = vmul.f32 %v1067, %v1067
        %v1080 = vmul.f32 %v1068, %v1068
        %v1081 = vmul.f32 %v1069, %v1069
        %v1082 = vmul.f32 %v1070, %v1070
        %v1083 = vmul.f32 %v1071, %v1071
        %v1084 = vmul.f32 %v1072, %v1072
        %v1085 = vmul.f32 %v1073, %v1073
        %v1086 = vmul.f32 %v1074, %v1074
        %v1087 = vmul.f32 %v1075, %v1075
        %v1088 = vmul.f32 %v1076, %v1076
        %v1089 = vmul.f32 %v1077, %v1077
        %v1090 = vadd.f32 %v1078, %v1084
        %v1091 = vadd.f32 %v1079, %v1085
        %v1092 = vadd.f32 %v1080, %v1086
        %v1093 = vadd.f32 %v1081, %v1087
        %v1094 = vadd.f32 %v1082, %v1088
        %v1095 = vadd.f32 %v1083, %v1089
        %v1096 = vrsqrt.pop %v1090
        %v1097 = vmul.f32 %v1090, %v1096
        %vm1098 = vcmp.eq.f32.partialorder %v1090, inf
        %v1099 = vsel %vm1098, %v1090, %v1097
        %vm1100 = vcmp.eq.f32.partialorder %v1090, 0.0
        %v1101 = vand.u32 %v1090, 2147483648
        %v1102 = vsel %vm1100, %v1101, %v1099
        %v1103 = vrsqrt.pop %v1091
        %v1104 = vmul.f32 %v1091, %v1103
        %vm1105 = vcmp.eq.f32.partialorder %v1091, inf
        %v1106 = vsel %vm1105, %v1091, %v1104
        %vm1107 = vcmp.eq.f32.partialorder %v1091, 0.0
        %v1108 = vand.u32 %v1091, 2147483648
        %v1109 = vsel %vm1107, %v1108, %v1106
        %v1110 = vrsqrt.pop %v1092
        %v1111 = vmul.f32 %v1092, %v1110
        %vm1112 = vcmp.eq.f32.partialorder %v1092, inf
        %v1113 = vsel %vm1112, %v1092, %v1111
        %vm1114 = vcmp.eq.f32.partialorder %v1092, 0.0
        %v1115 = vand.u32 %v1092, 2147483648
        %v1116 = vsel %vm1114, %v1115, %v1113
        %v1117 = vrsqrt.pop %v1093
        %v1118 = vmul.f32 %v1093, %v1117
        %vm1119 = vcmp.eq.f32.partialorder %v1093, inf
        %v1120 = vsel %vm1119, %v1093, %v1118
        %vm1121 = vcmp.eq.f32.partialorder %v1093, 0.0
        %v1122 = vand.u32 %v1093, 2147483648
        %v1123 = vsel %vm1121, %v1122, %v1120
        %v1124 = vrsqrt.pop %v1094
        %v1125 = vmul.f32 %v1094, %v1124
        %vm1126 = vcmp.eq.f32.partialorder %v1094, inf
        %v1127 = vsel %vm1126, %v1094, %v1125
        %vm1128 = vcmp.eq.f32.partialorder %v1094, 0.0
        %v1129 = vand.u32 %v1094, 2147483648
        %v1130 = vsel %vm1128, %v1129, %v1127
        %v1131 = vrsqrt.pop %v1095
        %v1132 = vmul.f32 %v1095, %v1131
        %vm1133 = vcmp.eq.f32.partialorder %v1095, inf
        %v1134 = vsel %vm1133, %v1095, %v1132
        %vm1135 = vcmp.eq.f32.partialorder %v1095, 0.0
        %v1136 = vand.u32 %v1095, 2147483648
        %v1137 = vsel %vm1135, %v1136, %v1134
        %1138 = vst [vmem:[%s265] sm:$0xff] %v1102
        %1139 = vst [vmem:[%s265 + $0x8] sm:$0xff] %v1109
        %1140 = vst [vmem:[%s265 + $0x10] sm:$0xff] %v1116
        %1141 = vst [vmem:[%s265 + $0x18] sm:$0xff] %v1123
        %1142 = vst [vmem:[%s265 + $0x20] sm:$0xff] %v1130
        %1143 = vst [vmem:[%s265 + $0x28] sm:$0xff] %v1137
        %s1144 = sand.u32 %s124, 1
        %s1145 = scalar_lea.sflag [#allocation4], %s1144
        %s1146 = sand.u32 %s124, 1
        %s1147 = smul.addr %s1146, 48
        %s1148 = scalar_lea.vmem [#allocation8], %s1147
        // Predicated region
        $region45: #{tpu_custom_call.1} parent=31 // pred_check
          %p1149 = pneg %p134
        $region46: #{tpu_custom_call.1} parent=31 // pred_check_branch
          %1151 = sbr.rel (%p1149) target = $region48
        $region47: #{tpu_custom_call.1} parent=31 // pred_region
          %s1153 = ssub.s32 768, 768
          %1154 = vsyncadd %s1145, %s1153
          %s1155 = smul.addr %s27, 6
          %s1156 = sadd.s32 %s28, %s1155
          %s1157 = smul.addr %s1156, 128
          %s1158 = scalar_lea.hbm %s3, %s1157
          %s1159 = sshll.u32 %s1148, 4
          %s1160 = int_to_ptr.vmem [resolvable:$true] %s1159
          %1165 = dma.vmem_to_hbm [thread:$0]  %s1160, 768, %s1158, %s1145, 128, 128, 8
        $region48: #{tpu_custom_call.1} parent=31 // pred_fallthru
          _
      $region32: #{tpu_custom_call.1} parent=5 // pred_fallthru
        _
      %p1166 = scmp.le.s32.totalorder 2, %s18
      // Predicated region
      $region49: #{tpu_custom_call.1} parent=5 // pred_check
        %p1167 = pneg %p1166
      $region50: #{tpu_custom_call.1} parent=5 // pred_check_branch
        %1169 = sbr.rel (%p1167) target = $region52
      $region51: #{tpu_custom_call.1} parent=5 // pred_region
        %s1170 = ssub.s32 %s18, 2
        // Predicated region
        $region53: #{tpu_custom_call.1} parent=51 // pred_check
          %p1171 = pneg %p140
        $region54: #{tpu_custom_call.1} parent=51 // pred_check_branch
          %1173 = sbr.rel (%p1171) target = $region56
        $region55: #{tpu_custom_call.1} parent=51 // pred_region
          %s1174 = sand.u32 %s125, 1
          %s1175 = scalar_lea.sflag [#allocation4], %s1174
          %s1176 = sand.u32 %s125, 1
          %s1177 = smul.addr %s1176, 48
          %s1178 = scalar_lea.vmem [#allocation8], %s1177
          %1179 = dma.done %s1175, 768
        $region56: #{tpu_custom_call.1} parent=51 // pred_fallthru
          _
      $region52: #{tpu_custom_call.1} parent=5 // pred_fallthru
        _
    $region6: #{tpu_custom_call.1} parent=1 // loop_footer
      %s22 = sadd.s32 1, %s18
    $region7: #{tpu_custom_call.1} parent=1 // loop_footer_branch
      %17 = sbr.rel target = $region3
    $region8: #{tpu_custom_call.1} parent=1 // loop_exit
      _
    %1180 = vsyncpa [#allocation3], 1
    %s1181 = scalar_lea.sflag [#allocation3], 1
    %1182 = vsyncpa %s1181, 1
    %1183 = vsyncpa [#allocation6], 1
    %s1184 = scalar_lea.sflag [#allocation6], 1
    %1185 = vsyncpa %s1184, 1
    %1186 = vsyncpa [#allocation4], 1
    %s1187 = scalar_lea.sflag [#allocation4], 1
    %1188 = vsyncpa %s1187, 1

</llo_original>
